<compile_context>
chip_gen: v5e
topology: v5e:2x2
jax: 0.10.0
libtpu: 0.0.40
codegen_flags: <defaults>
</compile_context>

<pallas_src>
import jax
import jax.numpy as jnp
from jax.experimental import pallas as pl


def _ensemble2_kernel(x_ref, w_ref, b_ref, o_ref):
    """Fused ensemble forward: out = x @ W_avg + b_avg  (single MXU dot)."""
    o_ref[...] = (
        jnp.dot(x_ref[...], w_ref[...], preferred_element_type=jnp.float32)
        + b_ref[...]
    ).astype(o_ref.dtype)


def _round_up(n, m):
    return ((n + m - 1) // m) * m


def ensemble2_forward(x_nchw, w1, b1, w2, b2):
    """x_nchw: [B, C, H, W] float32. Returns averaged logits [B, K]."""
    B, C, H, W = x_nchw.shape
    D = C * H * W
    K = w1.shape[1]

    # --- plain-JAX glue ------------------------------------------------------
    # Flatten NCHW -> [B, D] (matches torch .view(B, -1) on NCHW).
    x2d = x_nchw.reshape(B, D)

    # Algebraic fusion of the two linear nets (exact for linear members).
    w_avg = 0.5 * (w1 + w2)                       # [D, K]
    b_avg = (0.5 * (b1 + b2)).reshape(1, K)       # [1, K]

    # Lane-dense / sublane-dense padding.
    Bp = _round_up(B, 8)       # sublane tile
    Kp = _round_up(K, 128)     # lane tile

    x_pad = jnp.pad(x2d, ((0, Bp - B), (0, 0)))
    w_pad = jnp.pad(w_avg, ((0, 0), (0, Kp - K)))
    b_pad = jnp.pad(b_avg, ((0, 0), (0, Kp - K)))
    # -------------------------------------------------------------------------

    out_pad = pl.pallas_call(
        _ensemble2_kernel,
        out_shape=jax.ShapeDtypeStruct((Bp, Kp), jnp.float32),
        in_specs=[
            pl.BlockSpec((Bp, D), lambda: (0, 0)),   # x    (full-extent block)
            pl.BlockSpec((D, Kp), lambda: (0, 0)),   # W_avg
            pl.BlockSpec((1, Kp), lambda: (0, 0)),   # b_avg
        ],
        out_specs=pl.BlockSpec((Bp, Kp), lambda: (0, 0)),
    )(x_pad, w_pad, b_pad)

    # Strip padding back to the module's output shape.
    return out_pad[:B, :K]


if __name__ == "__main__":
    # Small shapes consistent with an NCHW image classifier input.
    B, C, H, W = 2, 4, 16, 16
    D = C * H * W          # 1024
    K = 10                 # num classes

    key = jax.random.PRNGKey(0)
    kx, kw1, kb1, kw2, kb2 = jax.random.split(key, 5)

    x = jax.random.normal(kx, (B, C, H, W), dtype=jnp.float32)
    w1 = jax.random.normal(kw1, (D, K), dtype=jnp.float32) * 0.02
    b1 = jax.random.normal(kb1, (K,), dtype=jnp.float32) * 0.1
    w2 = jax.random.normal(kw2, (D, K), dtype=jnp.float32) * 0.02
    b2 = jax.random.normal(kb2, (K,), dtype=jnp.float32) * 0.1

    out = ensemble2_forward(x, w1, b1, w2, b2)
    jax.block_until_ready(out)

    # Reference check in plain JAX (same semantics as PyTorch Ensemble2.forward).
    x2d = x.reshape(B, D)
    ref = ((x2d @ w1 + b1) + (x2d @ w2 + b2)) / 2.0
    assert out.shape == (B, K)
    assert jnp.allclose(out, ref, atol=1e-4, rtol=1e-4)

    print("KERNEL_OK")
</pallas_src>

<mosaic_0001>
module attributes {stable_mosaic.version = 11 : i64} {
  func.func @_ensemble2_kernel(%arg0: memref<8x1024xf32, #tpu.memory_space<vmem>>, %arg1: memref<1024x128xf32, #tpu.memory_space<vmem>>, %arg2: memref<1x128xf32, #tpu.memory_space<vmem>>, %arg3: memref<8x128xf32, #tpu.memory_space<vmem>>) attributes {dimension_semantics = [], scalar_prefetch = 0 : i64, scratch_operands = 0 : i64, tpu.core_type = #tpu.core_type<tc>} {
    %c0 = arith.constant 0 : index
    %c0_0 = arith.constant 0 : index
    %0 = vector.load %arg0[%c0, %c0_0] : memref<8x1024xf32, #tpu.memory_space<vmem>>, vector<8x1024xf32>
    %c0_1 = arith.constant 0 : index
    %c0_2 = arith.constant 0 : index
    %1 = vector.load %arg1[%c0_1, %c0_2] : memref<1024x128xf32, #tpu.memory_space<vmem>>, vector<1024x128xf32>
    %cst = arith.constant dense<0.000000e+00> : vector<8x128xf32>
    %2 = tpu.matmul %0, %1, %cst {dimension_numbers = #tpu.dot_dimension_numbers<[1], [0], [0], [1], [0, 0, 1, 1], [], []>} : vector<8x1024xf32>, vector<1024x128xf32>, vector<8x128xf32> -> vector<8x128xf32>
    %c0_3 = arith.constant 0 : index
    %c0_4 = arith.constant 0 : index
    %3 = vector.load %arg2[%c0_3, %c0_4] : memref<1x128xf32, #tpu.memory_space<vmem>>, vector<1x128xf32>
    %4 = vector.broadcast %3 : vector<1x128xf32> to vector<8x128xf32>
    %5 = arith.addf %2, %4 : vector<8x128xf32>
    %c0_5 = arith.constant 0 : index
    %c0_6 = arith.constant 0 : index
    %6 = vector.load %arg3[%c0_5, %c0_6] : memref<8x128xf32, #tpu.memory_space<vmem>>, vector<8x128xf32>
    tpu.vector_store %arg3[%c0_5, %c0_6], %5 {strides = array<i32>} : memref<8x128xf32, #tpu.memory_space<vmem>>, vector<8x128xf32>,
    return
  }
}

</mosaic_0001>

<llo_original>
// kernel: tpu_custom_call.1
$region0: #{tpu_custom_call.1}
  #allocation0 [shape = 'u32[]', space=smem, size = 0x4, offset = 0x4, fixed_abs, tag = 'smem constant byte address 0x4 - core index']
  #allocation1 [shape = 'u32[72,128]{1,0:T(1,128)}', space=vmem, size = 0x9000, scoped, tag = 'internal scratch']
  %s0 = inlined_call_operand.hbm [shape: f32[8,1024], index: 0, kind: input, shape index: {}]
  %s1 = inlined_call_operand.hbm [shape: f32[1024,128], index: 1, kind: input, shape index: {}]
  %s2 = inlined_call_operand.vmem [shape: f32[1,128], index: 2, kind: input, shape index: {}]
  %s3 = inlined_call_operand.hbm [shape: f32[8,128], index: 3, kind: output, shape index: {}]
  %s4 = sld [smem:[#allocation0]]
  $region30: #{tpu_custom_call.1} parent=0
    _
  %s6 = ssub.s32 1, %s4
  %s7 = scalar_select 0, %s6, %s4
  $region1: #{tpu_custom_call.1} parent=0
    #allocation2 [shape = 'u8[32768]{0}', space=vmem, size = 0x8000, scoped, tag = 'input window, operand 0, single buffered']
    #allocation3 [shape = 's32[1]{0}', space=sflag, size = 0x4, scoped, tag = 'scoped memory for tpu_custom_call.1']
    #allocation4 [shape = 's32[1]{0}', space=sflag, size = 0x4, scoped, tag = 'scoped memory for tpu_custom_call.1']
    #allocation5 [shape = 'u8[524288]{0}', space=vmem, size = 0x80000, scoped, tag = 'input window, operand 1, single buffered']
    #allocation6 [shape = 's32[1]{0}', space=sflag, size = 0x4, scoped, tag = 'scoped memory for tpu_custom_call.1']
    #allocation7 [shape = 'u8[4096]{0}', space=vmem, size = 0x1000, scoped, tag = 'output window, operand 0, single buffered']
    %8 = vsyncpa [#allocation3], 0
    %9 = vsyncpa [#allocation6], 0
    %10 = vsyncpa [#allocation4], 0
    // Predicated region
    $region2: #{tpu_custom_call.1} parent=1 // pred_check
      _
    $region3: #{tpu_custom_call.1} parent=1 // pred_check_branch
      %12 = sbr.rel (0) target = $region5
    $region4: #{tpu_custom_call.1} parent=1 // pred_region
      %14 = vsyncadd [#allocation3], 0
      %s16 = sshll.u32 %s0, 4
      %s17 = int_to_ptr.hbm [resolvable:$true] %s16
      %s18 = sshll.u32 [#allocation2], 4
      %s19 = int_to_ptr.vmem [resolvable:$true] %s18
      %21 = dma.hbm_to_vmem [thread:$0]  %s17, 1024, %s19, [#allocation3]
    $region5: #{tpu_custom_call.1} parent=1 // pred_fallthru
      _
    // Predicated region
    $region6: #{tpu_custom_call.1} parent=1 // pred_check
      _
    $region7: #{tpu_custom_call.1} parent=1 // pred_check_branch
      %23 = sbr.rel (0) target = $region9
    $region8: #{tpu_custom_call.1} parent=1 // pred_region
      %25 = vsyncadd [#allocation6], 0
      %s26 = sshll.u32 %s1, 4
      %s27 = int_to_ptr.hbm [resolvable:$true] %s26
      %s28 = sshll.u32 [#allocation5], 4
      %s29 = int_to_ptr.vmem [resolvable:$true] %s28
      %34 = dma.hbm_to_vmem [thread:$0]  %s27, 16384, %s29, [#allocation6], 128, 128, 8
    $region9: #{tpu_custom_call.1} parent=1 // pred_fallthru
      _
    // Predicated region
    $region10: #{tpu_custom_call.1} parent=1 // pred_check
      _
    $region11: #{tpu_custom_call.1} parent=1 // pred_check_branch
      %36 = sbr.rel (0) target = $region13
    $region12: #{tpu_custom_call.1} parent=1 // pred_region
      _
    $region13: #{tpu_custom_call.1} parent=1 // pred_fallthru
      _
    // Predicated region
    $region14: #{tpu_custom_call.1} parent=1 // pred_check
      _
    $region15: #{tpu_custom_call.1} parent=1 // pred_check_branch
      %38 = sbr.rel (0) target = $region17
    $region16: #{tpu_custom_call.1} parent=1 // pred_region
      %40 = dma.done [#allocation3], 1024
    $region17: #{tpu_custom_call.1} parent=1 // pred_fallthru
      _
    // Predicated region
    $region18: #{tpu_custom_call.1} parent=1 // pred_check
      _
    $region19: #{tpu_custom_call.1} parent=1 // pred_check_branch
      %42 = sbr.rel (0) target = $region21
    $region20: #{tpu_custom_call.1} parent=1 // pred_region
      %44 = dma.done [#allocation6], 16384
    $region21: #{tpu_custom_call.1} parent=1 // pred_fallthru
      _
    %v45 = vld [vmem:[#allocation2] sm:$0xff]
    %v46 = vld [vmem:[#allocation2 + $0x8] sm:$0xff]
    %v47 = vld [vmem:[#allocation2 + $0x10] sm:$0xff]
    %v48 = vld [vmem:[#allocation2 + $0x18] sm:$0xff]
    %v49 = vld [vmem:[#allocation2 + $0x20] sm:$0xff]
    %v50 = vld [vmem:[#allocation2 + $0x28] sm:$0xff]
    %v51 = vld [vmem:[#allocation2 + $0x30] sm:$0xff]
    %v52 = vld [vmem:[#allocation2 + $0x38] sm:$0xff]
    %v53 = vld [vmem:[#allocation5] sm:$0xff]
    %v54 = vld [vmem:[#allocation5 + $0x8] sm:$0xff]
    %v55 = vld [vmem:[#allocation5 + $0x10] sm:$0xff]
    %v56 = vld [vmem:[#allocation5 + $0x18] sm:$0xff]
    %v57 = vld [vmem:[#allocation5 + $0x20] sm:$0xff]
    %v58 = vld [vmem:[#allocation5 + $0x28] sm:$0xff]
    %v59 = vld [vmem:[#allocation5 + $0x30] sm:$0xff]
    %v60 = vld [vmem:[#allocation5 + $0x38] sm:$0xff]
    %v61 = vld [vmem:[#allocation5 + $0x40] sm:$0xff]
    %v62 = vld [vmem:[#allocation5 + $0x48] sm:$0xff]
    %v63 = vld [vmem:[#allocation5 + $0x50] sm:$0xff]
    %v64 = vld [vmem:[#allocation5 + $0x58] sm:$0xff]
    %v65 = vld [vmem:[#allocation5 + $0x60] sm:$0xff]
    %v66 = vld [vmem:[#allocation5 + $0x68] sm:$0xff]
    %v67 = vld [vmem:[#allocation5 + $0x70] sm:$0xff]
    %v68 = vld [vmem:[#allocation5 + $0x78] sm:$0xff]
    %v69 = vld [vmem:[#allocation5 + $0x80] sm:$0xff]
    %v70 = vld [vmem:[#allocation5 + $0x88] sm:$0xff]
    %v71 = vld [vmem:[#allocation5 + $0x90] sm:$0xff]
    %v72 = vld [vmem:[#allocation5 + $0x98] sm:$0xff]
    %v73 = vld [vmem:[#allocation5 + $0xa0] sm:$0xff]
    %v74 = vld [vmem:[#allocation5 + $0xa8] sm:$0xff]
    %v75 = vld [vmem:[#allocation5 + $0xb0] sm:$0xff]
    %v76 = vld [vmem:[#allocation5 + $0xb8] sm:$0xff]
    %v77 = vld [vmem:[#allocation5 + $0xc0] sm:$0xff]
    %v78 = vld [vmem:[#allocation5 + $0xc8] sm:$0xff]
    %v79 = vld [vmem:[#allocation5 + $0xd0] sm:$0xff]
    %v80 = vld [vmem:[#allocation5 + $0xd8] sm:$0xff]
    %v81 = vld [vmem:[#allocation5 + $0xe0] sm:$0xff]
    %v82 = vld [vmem:[#allocation5 + $0xe8] sm:$0xff]
    %v83 = vld [vmem:[#allocation5 + $0xf0] sm:$0xff]
    %v84 = vld [vmem:[#allocation5 + $0xf8] sm:$0xff]
    %v85 = vld [vmem:[#allocation5 + $0x100] sm:$0xff]
    %v86 = vld [vmem:[#allocation5 + $0x108] sm:$0xff]
    %v87 = vld [vmem:[#allocation5 + $0x110] sm:$0xff]
    %v88 = vld [vmem:[#allocation5 + $0x118] sm:$0xff]
    %v89 = vld [vmem:[#allocation5 + $0x120] sm:$0xff]
    %v90 = vld [vmem:[#allocation5 + $0x128] sm:$0xff]
    %v91 = vld [vmem:[#allocation5 + $0x130] sm:$0xff]
    %v92 = vld [vmem:[#allocation5 + $0x138] sm:$0xff]
    %v93 = vld [vmem:[#allocation5 + $0x140] sm:$0xff]
    %v94 = vld [vmem:[#allocation5 + $0x148] sm:$0xff]
    %v95 = vld [vmem:[#allocation5 + $0x150] sm:$0xff]
    %v96 = vld [vmem:[#allocation5 + $0x158] sm:$0xff]
    %v97 = vld [vmem:[#allocation5 + $0x160] sm:$0xff]
    %v98 = vld [vmem:[#allocation5 + $0x168] sm:$0xff]
    %v99 = vld [vmem:[#allocation5 + $0x170] sm:$0xff]
    %v100 = vld [vmem:[#allocation5 + $0x178] sm:$0xff]
    %v101 = vld [vmem:[#allocation5 + $0x180] sm:$0xff]
    %v102 = vld [vmem:[#allocation5 + $0x188] sm:$0xff]
    %v103 = vld [vmem:[#allocation5 + $0x190] sm:$0xff]
    %v104 = vld [vmem:[#allocation5 + $0x198] sm:$0xff]
    %v105 = vld [vmem:[#allocation5 + $0x1a0] sm:$0xff]
    %v106 = vld [vmem:[#allocation5 + $0x1a8] sm:$0xff]
    %v107 = vld [vmem:[#allocation5 + $0x1b0] sm:$0xff]
    %v108 = vld [vmem:[#allocation5 + $0x1b8] sm:$0xff]
    %v109 = vld [vmem:[#allocation5 + $0x1c0] sm:$0xff]
    %v110 = vld [vmem:[#allocation5 + $0x1c8] sm:$0xff]
    %v111 = vld [vmem:[#allocation5 + $0x1d0] sm:$0xff]
    %v112 = vld [vmem:[#allocation5 + $0x1d8] sm:$0xff]
    %v113 = vld [vmem:[#allocation5 + $0x1e0] sm:$0xff]
    %v114 = vld [vmem:[#allocation5 + $0x1e8] sm:$0xff]
    %v115 = vld [vmem:[#allocation5 + $0x1f0] sm:$0xff]
    %v116 = vld [vmem:[#allocation5 + $0x1f8] sm:$0xff]
    %v117 = vld [vmem:[#allocation5 + $0x200] sm:$0xff]
    %v118 = vld [vmem:[#allocation5 + $0x208] sm:$0xff]
    %v119 = vld [vmem:[#allocation5 + $0x210] sm:$0xff]
    %v120 = vld [vmem:[#allocation5 + $0x218] sm:$0xff]
    %v121 = vld [vmem:[#allocation5 + $0x220] sm:$0xff]
    %v122 = vld [vmem:[#allocation5 + $0x228] sm:$0xff]
    %v123 = vld [vmem:[#allocation5 + $0x230] sm:$0xff]
    %v124 = vld [vmem:[#allocation5 + $0x238] sm:$0xff]
    %v125 = vld [vmem:[#allocation5 + $0x240] sm:$0xff]
    %v126 = vld [vmem:[#allocation5 + $0x248] sm:$0xff]
    %v127 = vld [vmem:[#allocation5 + $0x250] sm:$0xff]
    %v128 = vld [vmem:[#allocation5 + $0x258] sm:$0xff]
    %v129 = vld [vmem:[#allocation5 + $0x260] sm:$0xff]
    %v130 = vld [vmem:[#allocation5 + $0x268] sm:$0xff]
    %v131 = vld [vmem:[#allocation5 + $0x270] sm:$0xff]
    %v132 = vld [vmem:[#allocation5 + $0x278] sm:$0xff]
    %v133 = vld [vmem:[#allocation5 + $0x280] sm:$0xff]
    %v134 = vld [vmem:[#allocation5 + $0x288] sm:$0xff]
    %v135 = vld [vmem:[#allocation5 + $0x290] sm:$0xff]
    %v136 = vld [vmem:[#allocation5 + $0x298] sm:$0xff]
    %v137 = vld [vmem:[#allocation5 + $0x2a0] sm:$0xff]
    %v138 = vld [vmem:[#allocation5 + $0x2a8] sm:$0xff]
    %v139 = vld [vmem:[#allocation5 + $0x2b0] sm:$0xff]
    %v140 = vld [vmem:[#allocation5 + $0x2b8] sm:$0xff]
    %v141 = vld [vmem:[#allocation5 + $0x2c0] sm:$0xff]
    %v142 = vld [vmem:[#allocation5 + $0x2c8] sm:$0xff]
    %v143 = vld [vmem:[#allocation5 + $0x2d0] sm:$0xff]
    %v144 = vld [vmem:[#allocation5 + $0x2d8] sm:$0xff]
    %v145 = vld [vmem:[#allocation5 + $0x2e0] sm:$0xff]
    %v146 = vld [vmem:[#allocation5 + $0x2e8] sm:$0xff]
    %v147 = vld [vmem:[#allocation5 + $0x2f0] sm:$0xff]
    %v148 = vld [vmem:[#allocation5 + $0x2f8] sm:$0xff]
    %v149 = vld [vmem:[#allocation5 + $0x300] sm:$0xff]
    %v150 = vld [vmem:[#allocation5 + $0x308] sm:$0xff]
    %v151 = vld [vmem:[#allocation5 + $0x310] sm:$0xff]
    %v152 = vld [vmem:[#allocation5 + $0x318] sm:$0xff]
    %v153 = vld [vmem:[#allocation5 + $0x320] sm:$0xff]
    %v154 = vld [vmem:[#allocation5 + $0x328] sm:$0xff]
    %v155 = vld [vmem:[#allocation5 + $0x330] sm:$0xff]
    %v156 = vld [vmem:[#allocation5 + $0x338] sm:$0xff]
    %v157 = vld [vmem:[#allocation5 + $0x340] sm:$0xff]
    %v158 = vld [vmem:[#allocation5 + $0x348] sm:$0xff]
    %v159 = vld [vmem:[#allocation5 + $0x350] sm:$0xff]
    %v160 = vld [vmem:[#allocation5 + $0x358] sm:$0xff]
    %v161 = vld [vmem:[#allocation5 + $0x360] sm:$0xff]
    %v162 = vld [vmem:[#allocation5 + $0x368] sm:$0xff]
    %v163 = vld [vmem:[#allocation5 + $0x370] sm:$0xff]
    %v164 = vld [vmem:[#allocation5 + $0x378] sm:$0xff]
    %v165 = vld [vmem:[#allocation5 + $0x380] sm:$0xff]
    %v166 = vld [vmem:[#allocation5 + $0x388] sm:$0xff]
    %v167 = vld [vmem:[#allocation5 + $0x390] sm:$0xff]
    %v168 = vld [vmem:[#allocation5 + $0x398] sm:$0xff]
    %v169 = vld [vmem:[#allocation5 + $0x3a0] sm:$0xff]
    %v170 = vld [vmem:[#allocation5 + $0x3a8] sm:$0xff]
    %v171 = vld [vmem:[#allocation5 + $0x3b0] sm:$0xff]
    %v172 = vld [vmem:[#allocation5 + $0x3b8] sm:$0xff]
    %v173 = vld [vmem:[#allocation5 + $0x3c0] sm:$0xff]
    %v174 = vld [vmem:[#allocation5 + $0x3c8] sm:$0xff]
    %v175 = vld [vmem:[#allocation5 + $0x3d0] sm:$0xff]
    %v176 = vld [vmem:[#allocation5 + $0x3d8] sm:$0xff]
    %v177 = vld [vmem:[#allocation5 + $0x3e0] sm:$0xff]
    %v178 = vld [vmem:[#allocation5 + $0x3e8] sm:$0xff]
    %v179 = vld [vmem:[#allocation5 + $0x3f0] sm:$0xff]
    %v180 = vld [vmem:[#allocation5 + $0x3f8] sm:$0xff]
    %v181 = vld [vmem:[%s2] sm:$0x1]
    %v183 = vperm.slane %v181, 0
    %185 = vmatpush.msra.mxu0 %v68
    %186 = vmatpush.msra.mxu0 %v67
    %187 = vmatpush.msra.mxu0 %v66
    %188 = vmatpush.msra.mxu0 %v65
    %189 = vmatpush.msra.mxu0 %v64
    %190 = vmatpush.msra.mxu0 %v63
    %191 = vmatpush.msra.mxu0 %v62
    %192 = vmatpush.msra.mxu0 %v61
    %193 = vmatpush.msra.mxu0 %v60
    %194 = vmatpush.msra.mxu0 %v59
    %195 = vmatpush.msra.mxu0 %v58
    %196 = vmatpush.msra.mxu0 %v57
    %197 = vmatpush.msra.mxu0 %v56
    %198 = vmatpush.msra.mxu0 %v55
    %199 = vmatpush.msra.mxu0 %v54
    %200 = vmatpush.msra.mxu0 %v53
    %201 = vmatmul.f32.gmra.mxu0 %v45
    %v202 = vpop.f32.mrf.mxu0
    %v203 = vadd.f32 %v183, %v202
    %204 = vdwg.mxu0
    %205 = vmatpush.msra.mxu0 %v84
    %206 = vmatpush.msra.mxu0 %v83
    %207 = vmatpush.msra.mxu0 %v82
    %208 = vmatpush.msra.mxu0 %v81
    %209 = vmatpush.msra.mxu0 %v80
    %210 = vmatpush.msra.mxu0 %v79
    %211 = vmatpush.msra.mxu0 %v78
    %212 = vmatpush.msra.mxu0 %v77
    %213 = vmatpush.msra.mxu0 %v76
    %214 = vmatpush.msra.mxu0 %v75
    %215 = vmatpush.msra.mxu0 %v74
    %216 = vmatpush.msra.mxu0 %v73
    %217 = vmatpush.msra.mxu0 %v72
    %218 = vmatpush.msra.mxu0 %v71
    %219 = vmatpush.msra.mxu0 %v70
    %220 = vmatpush.msra.mxu0 %v69
    %221 = vmatmul.f32.gmra.mxu0 %v46
    %v222 = vpop.f32.mrf.mxu0
    %v223 = vadd.f32 %v203, %v222
    %224 = vdwg.mxu0
    %225 = vmatpush.msra.mxu0 %v100
    %226 = vmatpush.msra.mxu0 %v99
    %227 = vmatpush.msra.mxu0 %v98
    %228 = vmatpush.msra.mxu0 %v97
    %229 = vmatpush.msra.mxu0 %v96
    %230 = vmatpush.msra.mxu0 %v95
    %231 = vmatpush.msra.mxu0 %v94
    %232 = vmatpush.msra.mxu0 %v93
    %233 = vmatpush.msra.mxu0 %v92
    %234 = vmatpush.msra.mxu0 %v91
    %235 = vmatpush.msra.mxu0 %v90
    %236 = vmatpush.msra.mxu0 %v89
    %237 = vmatpush.msra.mxu0 %v88
    %238 = vmatpush.msra.mxu0 %v87
    %239 = vmatpush.msra.mxu0 %v86
    %240 = vmatpush.msra.mxu0 %v85
    %241 = vmatmul.f32.gmra.mxu0 %v47
    %v242 = vpop.f32.mrf.mxu0
    %v243 = vadd.f32 %v223, %v242
    %244 = vdwg.mxu0
    %245 = vmatpush.msra.mxu0 %v116
    %246 = vmatpush.msra.mxu0 %v115
    %247 = vmatpush.msra.mxu0 %v114
    %248 = vmatpush.msra.mxu0 %v113
    %249 = vmatpush.msra.mxu0 %v112
    %250 = vmatpush.msra.mxu0 %v111
    %251 = vmatpush.msra.mxu0 %v110
    %252 = vmatpush.msra.mxu0 %v109
    %253 = vmatpush.msra.mxu0 %v108
    %254 = vmatpush.msra.mxu0 %v107
    %255 = vmatpush.msra.mxu0 %v106
    %256 = vmatpush.msra.mxu0 %v105
    %257 = vmatpush.msra.mxu0 %v104
    %258 = vmatpush.msra.mxu0 %v103
    %259 = vmatpush.msra.mxu0 %v102
    %260 = vmatpush.msra.mxu0 %v101
    %261 = vmatmul.f32.gmra.mxu0 %v48
    %v262 = vpop.f32.mrf.mxu0
    %v263 = vadd.f32 %v243, %v262
    %264 = vdwg.mxu0
    %265 = vmatpush.msra.mxu0 %v132
    %266 = vmatpush.msra.mxu0 %v131
    %267 = vmatpush.msra.mxu0 %v130
    %268 = vmatpush.msra.mxu0 %v129
    %269 = vmatpush.msra.mxu0 %v128
    %270 = vmatpush.msra.mxu0 %v127
    %271 = vmatpush.msra.mxu0 %v126
    %272 = vmatpush.msra.mxu0 %v125
    %273 = vmatpush.msra.mxu0 %v124
    %274 = vmatpush.msra.mxu0 %v123
    %275 = vmatpush.msra.mxu0 %v122
    %276 = vmatpush.msra.mxu0 %v121
    %277 = vmatpush.msra.mxu0 %v120
    %278 = vmatpush.msra.mxu0 %v119
    %279 = vmatpush.msra.mxu0 %v118
    %280 = vmatpush.msra.mxu0 %v117
    %281 = vmatmul.f32.gmra.mxu0 %v49
    %v282 = vpop.f32.mrf.mxu0
    %v283 = vadd.f32 %v263, %v282
    %284 = vdwg.mxu0
    %285 = vmatpush.msra.mxu0 %v148
    %286 = vmatpush.msra.mxu0 %v147
    %287 = vmatpush.msra.mxu0 %v146
    %288 = vmatpush.msra.mxu0 %v145
    %289 = vmatpush.msra.mxu0 %v144
    %290 = vmatpush.msra.mxu0 %v143
    %291 = vmatpush.msra.mxu0 %v142
    %292 = vmatpush.msra.mxu0 %v141
    %293 = vmatpush.msra.mxu0 %v140
    %294 = vmatpush.msra.mxu0 %v139
    %295 = vmatpush.msra.mxu0 %v138
    %296 = vmatpush.msra.mxu0 %v137
    %297 = vmatpush.msra.mxu0 %v136
    %298 = vmatpush.msra.mxu0 %v135
    %299 = vmatpush.msra.mxu0 %v134
    %300 = vmatpush.msra.mxu0 %v133
    %301 = vmatmul.f32.gmra.mxu0 %v50
    %v302 = vpop.f32.mrf.mxu0
    %v303 = vadd.f32 %v283, %v302
    %304 = vdwg.mxu0
    %305 = vmatpush.msra.mxu0 %v164
    %306 = vmatpush.msra.mxu0 %v163
    %307 = vmatpush.msra.mxu0 %v162
    %308 = vmatpush.msra.mxu0 %v161
    %309 = vmatpush.msra.mxu0 %v160
    %310 = vmatpush.msra.mxu0 %v159
    %311 = vmatpush.msra.mxu0 %v158
    %312 = vmatpush.msra.mxu0 %v157
    %313 = vmatpush.msra.mxu0 %v156
    %314 = vmatpush.msra.mxu0 %v155
    %315 = vmatpush.msra.mxu0 %v154
    %316 = vmatpush.msra.mxu0 %v153
    %317 = vmatpush.msra.mxu0 %v152
    %318 = vmatpush.msra.mxu0 %v151
    %319 = vmatpush.msra.mxu0 %v150
    %320 = vmatpush.msra.mxu0 %v149
    %321 = vmatmul.f32.gmra.mxu0 %v51
    %v322 = vpop.f32.mrf.mxu0
    %v323 = vadd.f32 %v303, %v322
    %324 = vdwg.mxu0
    %325 = vmatpush.msra.mxu0 %v180
    %326 = vmatpush.msra.mxu0 %v179
    %327 = vmatpush.msra.mxu0 %v178
    %328 = vmatpush.msra.mxu0 %v177
    %329 = vmatpush.msra.mxu0 %v176
    %330 = vmatpush.msra.mxu0 %v175
    %331 = vmatpush.msra.mxu0 %v174
    %332 = vmatpush.msra.mxu0 %v173
    %333 = vmatpush.msra.mxu0 %v172
    %334 = vmatpush.msra.mxu0 %v171
    %335 = vmatpush.msra.mxu0 %v170
    %336 = vmatpush.msra.mxu0 %v169
    %337 = vmatpush.msra.mxu0 %v168
    %338 = vmatpush.msra.mxu0 %v167
    %339 = vmatpush.msra.mxu0 %v166
    %340 = vmatpush.msra.mxu0 %v165
    %341 = vmatmul.f32.gmra.mxu0 %v52
    %v342 = vpop.f32.mrf.mxu0
    %v343 = vadd.f32 %v323, %v342
    %344 = vdwg.mxu0
    %345 = vst [vmem:[#allocation7] sm:$0xff] %v343
    // Predicated region
    $region22: #{tpu_custom_call.1} parent=1 // pred_check
      _
    $region23: #{tpu_custom_call.1} parent=1 // pred_check_branch
      %347 = sbr.rel (0) target = $region25
    $region24: #{tpu_custom_call.1} parent=1 // pred_region
      %349 = vsyncadd [#allocation4], 0
      %s351 = sshll.u32 [#allocation7], 4
      %s352 = int_to_ptr.vmem [resolvable:$true] %s351
      %s353 = sshll.u32 %s3, 4
      %s354 = int_to_ptr.hbm [resolvable:$true] %s353
      %356 = dma.vmem_to_hbm [thread:$0]  %s352, 128, %s354, [#allocation4]
    $region25: #{tpu_custom_call.1} parent=1 // pred_fallthru
      _
    // Predicated region
    $region26: #{tpu_custom_call.1} parent=1 // pred_check
      _
    $region27: #{tpu_custom_call.1} parent=1 // pred_check_branch
      %358 = sbr.rel (0) target = $region29
    $region28: #{tpu_custom_call.1} parent=1 // pred_region
      %360 = dma.done [#allocation4], 128
    $region29: #{tpu_custom_call.1} parent=1 // pred_fallthru
      _
    %361 = vsyncpa [#allocation3], 1
    %362 = vsyncpa [#allocation6], 1
    %363 = vsyncpa [#allocation4], 1

</llo_original>
